<compile_context>
chip_gen: v7x
topology: tpu7x:2x2x1
jax: 0.10.0
libtpu: 0.0.40
codegen_flags: <defaults>
</compile_context>

<pallas_src>
import jax
import jax.numpy as jnp
from jax.experimental import pallas as pl
from jax.experimental.pallas import tpu as pltpu


def _round_up(n, m):
    return ((n + m - 1) // m) * m


def _prob_net_kernel(x_ref, y_ref, w1x_ref, w1y_ref, b1_ref, w2d_ref, b2d_ref,
                     out_ref):
    # Cast activations to bf16 in VMEM (DMA stays f32; no wrapper-side copy).
    x_bf = x_ref[...].astype(jnp.bfloat16)
    y_bf = y_ref[...].astype(jnp.bfloat16)

    # pre_prob: Linear(2H -> H) on cat((x, y), dim=1), split into two matmuls
    # (split-K keeps v5e's 128-tall MXUs fully filled).  f32 accumulation.
    h = (jnp.dot(x_bf, w1x_ref[...], preferred_element_type=jnp.float32)
         + jnp.dot(y_bf, w1y_ref[...], preferred_element_type=jnp.float32)
         + b1_ref[...])
    # SiLU in f32 (sigmoid goes to the EUP slot, free under the MXU).
    h = h * jax.nn.sigmoid(h)

    # 2-class softmax == sigmoid of the logit difference.  Computed as a VPU
    # multiply + lane (XLU) reduction against a (1, H) row — no N=1 MXU matmul.
    logit = jnp.sum(h * w2d_ref[...], axis=-1, keepdims=True) + b2d_ref[...]
    out_ref[...] = jax.nn.sigmoid(logit).astype(out_ref.dtype)   # p1, [tile_b, 1]


def probability_network_forward(x, y, params, *, max_tile_b=4096):
    """x, y: [B, H] float32.  Returns (p0, p1), each [B] float32."""
    B, H = x.shape
    w1x, w1y, b1, w2t, b2 = params

    # One-time (tiny) parameter prep.
    w1x_bf = w1x.astype(jnp.bfloat16)
    w1y_bf = w1y.astype(jnp.bfloat16)
    b1_2d = b1.reshape(1, H).astype(jnp.float32)
    # Fold the 2-class head into a difference row (stored lane-major, (1, H)).
    w2d_row = (w2t[:, 1] - w2t[:, 0]).reshape(1, H).astype(jnp.float32)
    b2d = (b2[1] - b2[0]).reshape(1, 1).astype(jnp.float32)

    # Batch tiling: size tiles to the batch (no dead rows beyond rounding to 8)
    # and guarantee >= 2 tiles for large batches so v7x megacore can shard.
    n_tiles = max(1, pl.cdiv(B, max_tile_b))
    if n_tiles == 1 and B >= 512:
        n_tiles = 2
    tile_b = _round_up(pl.cdiv(B, n_tiles), 8)
    b_pad = tile_b * n_tiles

    x_in, y_in = x, y
    if b_pad != B:
        # TODO(synk): rely on Pallas overhang masking instead of this pad copy
        # when B is not a multiple of 8 (rows are independent, so it is safe).
        pad = ((0, b_pad - B), (0, 0))
        x_in = jnp.pad(x, pad)
        y_in = jnp.pad(y, pad)

    # Explicit VMEM budget (inputs double-buffered f32, weights resident but
    # conservatively counted twice), capped below v7x's 64 MiB physical VMEM.
    vmem_bytes = (
        2 * 2 * tile_b * H * 4      # x, y tiles: 2 inputs x 2 buffers, f32
        + 2 * 2 * H * H * 2         # w1x, w1y (bf16)
        + 2 * tile_b * 4            # output tile (1 column, f32) x 2 buffers
        + 4 * H * 4                 # biases / w2d row
        + (1 << 20)                 # slack for compiler scratch
    )
    vmem_limit = int(min(max(vmem_bytes, 4 << 20), 48 << 20))

    cost = pl.CostEstimate(
        flops=int(4 * b_pad * H * H + 4 * b_pad * H),
        transcendentals=int(b_pad * H + b_pad),
        bytes_accessed=int(2 * b_pad * H * 4 + 2 * H * H * 2
                           + 2 * H * 4 + b_pad * 4),
    )

    p1_col = pl.pallas_call(
        _prob_net_kernel,
        out_shape=jax.ShapeDtypeStruct((b_pad, 1), jnp.float32),
        grid=(n_tiles,),
        in_specs=[
            pl.BlockSpec((tile_b, H), lambda i: (i, 0)),   # x tile (f32)
            pl.BlockSpec((tile_b, H), lambda i: (i, 0)),   # y tile (f32)
            pl.BlockSpec((H, H), lambda i: (0, 0)),        # w1x (resident, bf16)
            pl.BlockSpec((H, H), lambda i: (0, 0)),        # w1y (resident, bf16)
            pl.BlockSpec((1, H), lambda i: (0, 0)),        # b1
            pl.BlockSpec((1, H), lambda i: (0, 0)),        # w2 diff row
            pl.BlockSpec((1, 1), lambda i: (0, 0)),        # b2 diff
        ],
        out_specs=pl.BlockSpec((tile_b, 1), lambda i: (i, 0)),
        compiler_params=pltpu.CompilerParams(
            dimension_semantics=("parallel",),
            vmem_limit_bytes=vmem_limit,
        ),
        cost_estimate=cost,
    )(x_in, y_in, w1x_bf, w1y_bf, b1_2d, w2d_row, b2d)

    p1 = p1_col[:B, 0]
    p0 = 1.0 - p1        # fuses into the slice read; no extra kernel needed
    return p0, p1


def init_params(key, hidden_dim):
    """Deterministic synthetic init matching nn.Linear shapes.
       pre_prob.weight: [H, 2H] -> stored as w1x [H,H], w1y [H,H] (transposed halves)
       pre_prob.bias:   [H]
       prob.weight:     [2, H]  -> stored as w2t [H, 2] (transposed)
       prob.bias:       [2]
    """
    k1, k2, k3, k4 = jax.random.split(key, 4)
    H = hidden_dim
    lim1 = 1.0 / jnp.sqrt(2.0 * H)
    w1 = jax.random.uniform(k1, (H, 2 * H), jnp.float32, -lim1, lim1)
    b1 = jax.random.uniform(k2, (H,), jnp.float32, -lim1, lim1)
    lim2 = 1.0 / jnp.sqrt(1.0 * H)
    w2 = jax.random.uniform(k3, (2, H), jnp.float32, -lim2, lim2)
    b2 = jax.random.uniform(k4, (2,), jnp.float32, -lim2, lim2)
    w1x = w1[:, :H].T        # [H, H]
    w1y = w1[:, H:].T        # [H, H]
    w2t = w2.T               # [H, 2]
    return (w1x, w1y, b1, w2t, b2)


def _reference_f32(x, y, params):
    """Exact module semantics in f32 (Linear -> SiLU -> Linear -> Softmax)."""
    w1x, w1y, b1, w2t, b2 = params
    h = x @ w1x + y @ w1y + b1
    h = h * jax.nn.sigmoid(h)
    logits = h @ w2t + b2
    p = jax.nn.softmax(logits, axis=1)
    return p[:, 0], p[:, 1]


def _reference_bf16(x, y, params):
    """Same math but with bf16 matmul operands (mirrors the kernel's cast)."""
    w1x, w1y, b1, w2t, b2 = params
    h = (jnp.dot(x.astype(jnp.bfloat16), w1x.astype(jnp.bfloat16),
                 preferred_element_type=jnp.float32)
         + jnp.dot(y.astype(jnp.bfloat16), w1y.astype(jnp.bfloat16),
                   preferred_element_type=jnp.float32)
         + b1)
    h = h * jax.nn.sigmoid(h)
    logits = h @ w2t + b2
    p = jax.nn.softmax(logits, axis=1)
    return p[:, 0], p[:, 1]


def _check(B, H, seed, tight_atol, loose_atol):
    key = jax.random.PRNGKey(seed)
    kx, ky, kp = jax.random.split(key, 3)
    x = jax.random.normal(kx, (B, H), jnp.float32)
    y = jax.random.normal(ky, (B, H), jnp.float32)
    params = init_params(kp, H)

    p0, p1 = probability_network_forward(x, y, params)
    jax.block_until_ready((p0, p1))

    m0, m1 = _reference_bf16(x, y, params)
    assert jnp.allclose(p0, m0, atol=tight_atol), "p0 mismatch (bf16 ref)"
    assert jnp.allclose(p1, m1, atol=tight_atol), "p1 mismatch (bf16 ref)"

    r0, r1 = _reference_f32(x, y, params)
    assert jnp.allclose(p0, r0, atol=loose_atol), "p0 mismatch (f32 ref)"
    assert jnp.allclose(p1, r1, atol=loose_atol), "p1 mismatch (f32 ref)"

    assert jnp.allclose(p0 + p1, jnp.ones_like(p0), atol=1e-5), "probs don't sum to 1"
    assert p0.shape == (B,) and p1.shape == (B,)


if __name__ == "__main__":
    # Small shape consistent with the module (hidden=32, batch=8).
    _check(B=8, H=32, seed=0, tight_atol=1e-3, loose_atol=2e-2)
    # Batch not a multiple of 8: exercises the minimal-pad fallback.
    _check(B=50, H=32, seed=2, tight_atol=1e-3, loose_atol=2e-2)
    # Exercise the multi-tile (>=2 tiles for v7x megacore), zero-pad path.
    _check(B=2304, H=128, seed=1, tight_atol=2e-3, loose_atol=3e-2)
    print("KERNEL_OK")
</pallas_src>

<mosaic_0001>
module attributes {stable_mosaic.version = 11 : i64} {
  func.func @_prob_net_kernel(%arg0: i32, %arg1: memref<8x32xf32, #tpu.memory_space<vmem>>, %arg2: memref<8x32xf32, #tpu.memory_space<vmem>>, %arg3: memref<32x32xbf16, #tpu.memory_space<vmem>>, %arg4: memref<32x32xbf16, #tpu.memory_space<vmem>>, %arg5: memref<1x32xf32, #tpu.memory_space<vmem>>, %arg6: memref<1x32xf32, #tpu.memory_space<vmem>>, %arg7: memref<1x1xf32, #tpu.memory_space<vmem>>, %arg8: memref<8x1xf32, #tpu.memory_space<vmem>>) attributes {dimension_semantics = [#tpu.dimension_semantics<parallel>], iteration_bounds = array<i64: 1>, scalar_prefetch = 0 : i64, scratch_operands = 0 : i64, tpu.core_type = #tpu.core_type<tc>, window_params = [{transform_indices = @transform_0, window_bounds = array<i64: 8, 32>}, {transform_indices = @transform_1, window_bounds = array<i64: 8, 32>}, {pipeline_mode = #tpu.pipeline_mode<synchronous>, transform_indices = @transform_2, window_bounds = array<i64: 32, 32>}, {pipeline_mode = #tpu.pipeline_mode<synchronous>, transform_indices = @transform_3, window_bounds = array<i64: 32, 32>}, {pipeline_mode = #tpu.pipeline_mode<synchronous>, transform_indices = @transform_4, window_bounds = array<i64: 1, 32>}, {pipeline_mode = #tpu.pipeline_mode<synchronous>, transform_indices = @transform_5, window_bounds = array<i64: 1, 32>}, {pipeline_mode = #tpu.pipeline_mode<synchronous>, transform_indices = @transform_6, window_bounds = array<i64: 1, 1>}, {transform_indices = @transform_7, window_bounds = array<i64: 8, 1>}]} {
    %c0 = arith.constant 0 : index
    %c0_0 = arith.constant 0 : index
    %0 = vector.load %arg1[%c0, %c0_0] : memref<8x32xf32, #tpu.memory_space<vmem>>, vector<8x32xf32>
    %1 = arith.truncf %0 : vector<8x32xf32> to vector<8x32xbf16>
    %c0_1 = arith.constant 0 : index
    %c0_2 = arith.constant 0 : index
    %2 = vector.load %arg2[%c0_1, %c0_2] : memref<8x32xf32, #tpu.memory_space<vmem>>, vector<8x32xf32>
    %3 = arith.truncf %2 : vector<8x32xf32> to vector<8x32xbf16>
    %c0_3 = arith.constant 0 : index
    %c0_4 = arith.constant 0 : index
    %4 = vector.load %arg3[%c0_3, %c0_4] : memref<32x32xbf16, #tpu.memory_space<vmem>>, vector<32x32xbf16>
    %cst = arith.constant dense<0.000000e+00> : vector<8x32xf32>
    %5 = tpu.matmul %1, %4, %cst {dimension_numbers = #tpu.dot_dimension_numbers<[1], [0], [0], [1], [0, 0, 1, 1], [], []>} : vector<8x32xbf16>, vector<32x32xbf16>, vector<8x32xf32> -> vector<8x32xf32>
    %c0_5 = arith.constant 0 : index
    %c0_6 = arith.constant 0 : index
    %6 = vector.load %arg4[%c0_5, %c0_6] : memref<32x32xbf16, #tpu.memory_space<vmem>>, vector<32x32xbf16>
    %cst_7 = arith.constant dense<0.000000e+00> : vector<8x32xf32>
    %7 = tpu.matmul %3, %6, %cst_7 {dimension_numbers = #tpu.dot_dimension_numbers<[1], [0], [0], [1], [0, 0, 1, 1], [], []>} : vector<8x32xbf16>, vector<32x32xbf16>, vector<8x32xf32> -> vector<8x32xf32>
    %8 = arith.addf %5, %7 : vector<8x32xf32>
    %c0_8 = arith.constant 0 : index
    %c0_9 = arith.constant 0 : index
    %9 = vector.load %arg5[%c0_8, %c0_9] : memref<1x32xf32, #tpu.memory_space<vmem>>, vector<1x32xf32>
    %10 = vector.broadcast %9 : vector<1x32xf32> to vector<8x32xf32>
    %11 = arith.addf %8, %10 : vector<8x32xf32>
    %12 = arith.negf %11 : vector<8x32xf32>
    %13 = math.exp %12 : vector<8x32xf32>
    %cst_10 = arith.constant 1.000000e+00 : f32
    %14 = vector.broadcast %cst_10 : f32 to vector<8x32xf32>
    %15 = arith.addf %14, %13 : vector<8x32xf32>
    %16 = arith.divf %14, %15 : vector<8x32xf32>
    %17 = arith.mulf %11, %16 : vector<8x32xf32>
    %c0_11 = arith.constant 0 : index
    %c0_12 = arith.constant 0 : index
    %18 = vector.load %arg6[%c0_11, %c0_12] : memref<1x32xf32, #tpu.memory_space<vmem>>, vector<1x32xf32>
    %19 = vector.broadcast %18 : vector<1x32xf32> to vector<8x32xf32>
    %20 = arith.mulf %17, %19 : vector<8x32xf32>
    %cst_13 = arith.constant dense<0.000000e+00> : vector<8xf32>
    %21 = vector.multi_reduction <add>, %20, %cst_13 [1] : vector<8x32xf32> to vector<8xf32>
    %22 = vector.shape_cast %21 : vector<8xf32> to vector<8x1xf32>
    %c0_14 = arith.constant 0 : index
    %c0_15 = arith.constant 0 : index
    %23 = vector.load %arg7[%c0_14, %c0_15] : memref<1x1xf32, #tpu.memory_space<vmem>>, vector<1x1xf32>
    %24 = vector.broadcast %23 : vector<1x1xf32> to vector<8x1xf32>
    %25 = arith.addf %22, %24 : vector<8x1xf32>
    %26 = arith.negf %25 : vector<8x1xf32>
    %27 = math.exp %26 : vector<8x1xf32>
    %cst_16 = arith.constant 1.000000e+00 : f32
    %28 = vector.broadcast %cst_16 : f32 to vector<8x1xf32>
    %29 = arith.addf %28, %27 : vector<8x1xf32>
    %30 = arith.divf %28, %29 : vector<8x1xf32>
    %c0_17 = arith.constant 0 : index
    %c0_18 = arith.constant 0 : index
    %31 = vector.load %arg8[%c0_17, %c0_18] : memref<8x1xf32, #tpu.memory_space<vmem>>, vector<8x1xf32>
    tpu.vector_store %arg8[%c0_17, %c0_18], %30 {strides = array<i32>} : memref<8x1xf32, #tpu.memory_space<vmem>>, vector<8x1xf32>,
    return
  }
  func.func @transform_0(%arg0: i32) -> (i32, i32) {
    %c0_i32 = arith.constant 0 : i32
    %c0_i32_0 = arith.constant 0 : i32
    return %arg0, %c0_i32 : i32, i32
  }
  func.func @transform_1(%arg0: i32) -> (i32, i32) {
    %c0_i32 = arith.constant 0 : i32
    %c0_i32_0 = arith.constant 0 : i32
    return %arg0, %c0_i32 : i32, i32
  }
  func.func @transform_2(%arg0: i32) -> (i32, i32) {
    %c0_i32 = arith.constant 0 : i32
    %c0_i32_0 = arith.constant 0 : i32
    %c0_i32_1 = arith.constant 0 : i32
    return %c0_i32, %c0_i32_0 : i32, i32
  }
  func.func @transform_3(%arg0: i32) -> (i32, i32) {
    %c0_i32 = arith.constant 0 : i32
    %c0_i32_0 = arith.constant 0 : i32
    %c0_i32_1 = arith.constant 0 : i32
    return %c0_i32, %c0_i32_0 : i32, i32
  }
  func.func @transform_4(%arg0: i32) -> (i32, i32) {
    %c0_i32 = arith.constant 0 : i32
    %c0_i32_0 = arith.constant 0 : i32
    %c0_i32_1 = arith.constant 0 : i32
    return %c0_i32, %c0_i32_0 : i32, i32
  }
  func.func @transform_5(%arg0: i32) -> (i32, i32) {
    %c0_i32 = arith.constant 0 : i32
    %c0_i32_0 = arith.constant 0 : i32
    %c0_i32_1 = arith.constant 0 : i32
    return %c0_i32, %c0_i32_0 : i32, i32
  }
  func.func @transform_6(%arg0: i32) -> (i32, i32) {
    %c0_i32 = arith.constant 0 : i32
    %c0_i32_0 = arith.constant 0 : i32
    %c0_i32_1 = arith.constant 0 : i32
    return %c0_i32, %c0_i32_0 : i32, i32
  }
  func.func @transform_7(%arg0: i32) -> (i32, i32) {
    %c0_i32 = arith.constant 0 : i32
    %c0_i32_0 = arith.constant 0 : i32
    return %arg0, %c0_i32 : i32, i32
  }
}

</mosaic_0001>

<llo_original>
// kernel: tpu_custom_call.1
$region0: #{tpu_custom_call.1}
  #allocation0 [shape = 'u32[]', space=smem, size = 0x4, offset = 0x4, fixed_abs, tag = 'smem constant byte address 0x4 - core index']
  #allocation1 [shape = 'u32[144,128]{1,0:T(1,128)}', space=vmem, size = 0x12000, scoped, tag = 'internal scratch']
  #allocation2 [shape = 'f32[1,1]{1,0:T(1,128)S(1)}', space=vmem, size = 0x200, scoped, tag = 'scoped memory for tpu_custom_call.1']
  %s0 = inlined_call_operand.hbm [shape: f32[8,32], index: 0, kind: input, shape index: {}]
  %s1 = inlined_call_operand.hbm [shape: f32[8,32], index: 1, kind: input, shape index: {}]
  %s2 = inlined_call_operand.hbm [shape: bf16[32,32], index: 2, kind: input, shape index: {}]
  %s3 = inlined_call_operand.hbm [shape: bf16[32,32], index: 3, kind: input, shape index: {}]
  %s4 = inlined_call_operand.vmem [shape: f32[1,32], index: 4, kind: input, shape index: {}]
  %s5 = inlined_call_operand.vmem [shape: f32[1,32], index: 5, kind: input, shape index: {}]
  %s6 = inlined_call_operand.<no memory space> [shape: f32[1,1], index: 6, kind: input, shape index: {}]
  %s7 = inlined_call_operand.vmem [shape: f32[8,1], index: 7, kind: output, shape index: {}]
  %s8 = sld [smem:[#allocation0]]
  $region54: #{tpu_custom_call.1} parent=0
    _
  %s10 = ssub.s32 1, %s8
  %s11 = scalar_select 0, %s10, %s8
  %v12 = vstv %s6
  %13 = vst [vmem:[#allocation2] sm:$0x1] %v12
  $region1: #{tpu_custom_call.1} parent=0
    #allocation3 [shape = 'u8[4096]{0}', space=vmem, size = 0x1000, scoped, tag = 'input window, operand 0, single buffered']
    #allocation4 [shape = 's32[1]{0}', space=sflag, size = 0x4, scoped, tag = 'scoped memory for tpu_custom_call.1']
    #allocation5 [shape = 'u8[4096]{0}', space=vmem, size = 0x1000, scoped, tag = 'input window, operand 1, single buffered']
    #allocation6 [shape = 's32[1]{0}', space=sflag, size = 0x4, scoped, tag = 'scoped memory for tpu_custom_call.1']
    #allocation7 [shape = 'u8[8192]{0}', space=vmem, size = 0x2000, scoped, tag = 'input window, operand 2, single buffered']
    #allocation8 [shape = 'u8[8192]{0}', space=vmem, size = 0x2000, scoped, tag = 'input window, operand 3, single buffered']
    #allocation9 [shape = 's32[1]{0}', space=sflag, size = 0x4, scoped, tag = 'scoped memory for tpu_custom_call.1']
    %14 = vsyncpa [#allocation4], 0
    %15 = vsyncpa [#allocation6], 0
    %16 = vsyncpa [#allocation9], 0
    // Predicated region
    $region2: #{tpu_custom_call.1} parent=1 // pred_check
      _
    $region3: #{tpu_custom_call.1} parent=1 // pred_check_branch
      %18 = sbr.rel (0) target = $region5
    $region4: #{tpu_custom_call.1} parent=1 // pred_region
      %s20 = ssub.s32 128, 128
      %21 = vsyncadd [#allocation4], %s20
      %s23 = sshll.u32 [#allocation3], 4
      %s24 = int_to_ptr.vmem [resolvable:$true] %s23
      %26 = dma.hbm_to_vmem [thread:$0]  %s0, 128, %s24, [#allocation4]
    $region5: #{tpu_custom_call.1} parent=1 // pred_fallthru
      _
    // Predicated region
    $region6: #{tpu_custom_call.1} parent=1 // pred_check
      _
    $region7: #{tpu_custom_call.1} parent=1 // pred_check_branch
      %28 = sbr.rel (0) target = $region9
    $region8: #{tpu_custom_call.1} parent=1 // pred_region
      %s30 = ssub.s32 128, 128
      %31 = vsyncadd [#allocation6], %s30
      %s33 = sshll.u32 [#allocation5], 4
      %s34 = int_to_ptr.vmem [resolvable:$true] %s33
      %36 = dma.hbm_to_vmem [thread:$0]  %s1, 128, %s34, [#allocation6]
    $region9: #{tpu_custom_call.1} parent=1 // pred_fallthru
      _
    // Predicated region
    $region10: #{tpu_custom_call.1} parent=1 // pred_check
      _
    $region11: #{tpu_custom_call.1} parent=1 // pred_check_branch
      %38 = sbr.rel (0) target = $region13
    $region12: #{tpu_custom_call.1} parent=1 // pred_region
      %s40 = ssub.s32 256, 256
      %41 = vsyncadd [#allocation6], %s40
      %s42 = sshll.u32 [#allocation7], 4
      %s43 = int_to_ptr.vmem [resolvable:$true] %s42
      %48 = dma.hbm_to_vmem [thread:$0]  %s2, 256, %s43, [#allocation6], 64, 64, 4
    $region13: #{tpu_custom_call.1} parent=1 // pred_fallthru
      _
    // Predicated region
    $region14: #{tpu_custom_call.1} parent=1 // pred_check
      _
    $region15: #{tpu_custom_call.1} parent=1 // pred_check_branch
      %50 = sbr.rel (0) target = $region17
    $region16: #{tpu_custom_call.1} parent=1 // pred_region
      %s52 = ssub.s32 256, 256
      %53 = vsyncadd [#allocation9], %s52
      %s54 = sshll.u32 [#allocation8], 4
      %s55 = int_to_ptr.vmem [resolvable:$true] %s54
      %60 = dma.hbm_to_vmem [thread:$0]  %s3, 256, %s55, [#allocation9], 64, 64, 4
    $region17: #{tpu_custom_call.1} parent=1 // pred_fallthru
      _
    // Predicated region
    $region18: #{tpu_custom_call.1} parent=1 // pred_check
      _
    $region19: #{tpu_custom_call.1} parent=1 // pred_check_branch
      %62 = sbr.rel (0) target = $region21
    $region20: #{tpu_custom_call.1} parent=1 // pred_region
      _
    $region21: #{tpu_custom_call.1} parent=1 // pred_fallthru
      _
    // Predicated region
    $region22: #{tpu_custom_call.1} parent=1 // pred_check
      _
    $region23: #{tpu_custom_call.1} parent=1 // pred_check_branch
      %64 = sbr.rel (0) target = $region25
    $region24: #{tpu_custom_call.1} parent=1 // pred_region
      _
    $region25: #{tpu_custom_call.1} parent=1 // pred_fallthru
      _
    // Predicated region
    $region26: #{tpu_custom_call.1} parent=1 // pred_check
      _
    $region27: #{tpu_custom_call.1} parent=1 // pred_check_branch
      %66 = sbr.rel (0) target = $region29
    $region28: #{tpu_custom_call.1} parent=1 // pred_region
      _
    $region29: #{tpu_custom_call.1} parent=1 // pred_fallthru
      _
    // Predicated region
    $region30: #{tpu_custom_call.1} parent=1 // pred_check
      _
    $region31: #{tpu_custom_call.1} parent=1 // pred_check_branch
      %68 = sbr.rel (0) target = $region33
    $region32: #{tpu_custom_call.1} parent=1 // pred_region
      %69 = dma.done [#allocation4], 128
    $region33: #{tpu_custom_call.1} parent=1 // pred_fallthru
      _
    // Predicated region
    $region34: #{tpu_custom_call.1} parent=1 // pred_check
      _
    $region35: #{tpu_custom_call.1} parent=1 // pred_check_branch
      %71 = sbr.rel (0) target = $region37
    $region36: #{tpu_custom_call.1} parent=1 // pred_region
      %72 = dma.done [#allocation6], 128
    $region37: #{tpu_custom_call.1} parent=1 // pred_fallthru
      _
    // Predicated region
    $region38: #{tpu_custom_call.1} parent=1 // pred_check
      _
    $region39: #{tpu_custom_call.1} parent=1 // pred_check_branch
      %74 = sbr.rel (0) target = $region41
    $region40: #{tpu_custom_call.1} parent=1 // pred_region
      %75 = dma.done [#allocation6], 256
    $region41: #{tpu_custom_call.1} parent=1 // pred_fallthru
      _
    // Predicated region
    $region42: #{tpu_custom_call.1} parent=1 // pred_check
      _
    $region43: #{tpu_custom_call.1} parent=1 // pred_check_branch
      %77 = sbr.rel (0) target = $region45
    $region44: #{tpu_custom_call.1} parent=1 // pred_region
      %78 = dma.done [#allocation9], 256
    $region45: #{tpu_custom_call.1} parent=1 // pred_fallthru
      _
    %v80 = vld [vmem:[#allocation3] sm:$0xff]
    %v81 = vpack.c.bf16 %v80, %v80
    %v82 = vld [vmem:[#allocation5] sm:$0xff]
    %v83 = vpack.c.bf16 %v82, %v82
    %v84 = vld [vmem:[#allocation7] sm:$0xf]
    %v85 = vld [vmem:[#allocation7 + $0x4] sm:$0xf]
    %v86 = vld [vmem:[#allocation7 + $0x8] sm:$0xf]
    %v87 = vld [vmem:[#allocation7 + $0xc] sm:$0xf]
    %v88 = vld [vmem:[#allocation8] sm:$0xf]
    %v89 = vld [vmem:[#allocation8 + $0x4] sm:$0xf]
    %v90 = vld [vmem:[#allocation8 + $0x8] sm:$0xf]
    %v91 = vld [vmem:[#allocation8 + $0xc] sm:$0xf]
    %v96 = vunpack.c.l.b16 %v88
    %v97 = vunpack.c.l.b16 %v89
    %v98 = vunpack.c.l.b16 %v90
    %v99 = vunpack.c.l.b16 %v91
    %v100 = vpack.c.b16 %v97, %v96
    %v101 = vpack.c.b16 %v99, %v98
    %vm104 = vcmask 261120
    %v106 = vsel %vm104, %v83, 0
    %108 = vmatprep.subr.bf16.mxu0 0
    %109 = vmatpush1.bf16.msra.mxu0 %v100
    %110 = vmatprep.subr.bf16.mxu0 0
    %111 = vmatpush1.bf16.msra.mxu0 %v101
    %112 = vmatprep.subr.bf16.mxu0 0
    %113 = vmatpush1.bf16.msra.mxu0 0
    %114 = vmatprep.subr.bf16.mxu0 0
    %115 = vmatpush1.bf16.msra.mxu0 0
    %116 = vmatprep.subr.bf16.mxu0 0
    %117 = vmatpush1.bf16.msra.mxu0 0
    %118 = vmatprep.subr.bf16.mxu0 0
    %119 = vmatpush1.bf16.msra.mxu0 0
    %120 = vmatprep.subr.bf16.mxu0 0
    %121 = vmatpush1.bf16.msra.mxu0 0
    %122 = vmatprep.subr.bf16.mxu0 0
    %123 = vmatpush1.bf16.msra.mxu0 0
    %124 = vmatprep.subr.bf16.mxu0 0
    %125 = vmatpush1.bf16.msra.mxu0 0
    %126 = vmatprep.subr.bf16.mxu0 0
    %127 = vmatpush1.bf16.msra.mxu0 0
    %128 = vmatprep.subr.bf16.mxu0 0
    %129 = vmatpush1.bf16.msra.mxu0 0
    %130 = vmatprep.subr.bf16.mxu0 0
    %131 = vmatpush1.bf16.msra.mxu0 0
    %132 = vmatprep.subr.bf16.mxu0 0
    %133 = vmatpush1.bf16.msra.mxu0 0
    %134 = vmatprep.subr.bf16.mxu0 0
    %135 = vmatpush1.bf16.msra.mxu0 0
    %136 = vmatprep.subr.bf16.mxu0 0
    %137 = vmatpush1.bf16.msra.mxu0 0
    %138 = vmatprep.subr.bf16.mxu0 0
    %139 = vmatpush1.bf16.msra.mxu0 0
    %140 = vmatprep.mubr.bf16.mxu0 0
    %141 = vmatmul.mubr.bf16.gmra.mrb[0].mxu0 %v106
    %v142 = vpop.f32.mrb[0].mxu0
    %v143 = vadd.f32 0.0, %v142
    %v144 = vpop.f32.mrb[0].mxu0
    %v145 = vpop.f32.mrb[0].mxu0
    %v146 = vpop.f32.mrb[0].mxu0
    %147 = vdwg.mxu0
    %v152 = vunpack.c.l.b16 %v84
    %v153 = vunpack.c.l.b16 %v85
    %v154 = vunpack.c.l.b16 %v86
    %v155 = vunpack.c.l.b16 %v87
    %v156 = vpack.c.b16 %v153, %v152
    %v157 = vpack.c.b16 %v155, %v154
    %v161 = vsel %vm104, %v81, 0
    %163 = vmatprep.subr.bf16.mxu0 0
    %164 = vmatpush1.bf16.msra.mxu0 %v156
    %165 = vmatprep.subr.bf16.mxu0 0
    %166 = vmatpush1.bf16.msra.mxu0 %v157
    %167 = vmatprep.subr.bf16.mxu0 0
    %168 = vmatpush1.bf16.msra.mxu0 0
    %169 = vmatprep.subr.bf16.mxu0 0
    %170 = vmatpush1.bf16.msra.mxu0 0
    %171 = vmatprep.subr.bf16.mxu0 0
    %172 = vmatpush1.bf16.msra.mxu0 0
    %173 = vmatprep.subr.bf16.mxu0 0
    %174 = vmatpush1.bf16.msra.mxu0 0
    %175 = vmatprep.subr.bf16.mxu0 0
    %176 = vmatpush1.bf16.msra.mxu0 0
    %177 = vmatprep.subr.bf16.mxu0 0
    %178 = vmatpush1.bf16.msra.mxu0 0
    %179 = vmatprep.subr.bf16.mxu0 0
    %180 = vmatpush1.bf16.msra.mxu0 0
    %181 = vmatprep.subr.bf16.mxu0 0
    %182 = vmatpush1.bf16.msra.mxu0 0
    %183 = vmatprep.subr.bf16.mxu0 0
    %184 = vmatpush1.bf16.msra.mxu0 0
    %185 = vmatprep.subr.bf16.mxu0 0
    %186 = vmatpush1.bf16.msra.mxu0 0
    %187 = vmatprep.subr.bf16.mxu0 0
    %188 = vmatpush1.bf16.msra.mxu0 0
    %189 = vmatprep.subr.bf16.mxu0 0
    %190 = vmatpush1.bf16.msra.mxu0 0
    %191 = vmatprep.subr.bf16.mxu0 0
    %192 = vmatpush1.bf16.msra.mxu0 0
    %193 = vmatprep.subr.bf16.mxu0 0
    %194 = vmatpush1.bf16.msra.mxu0 0
    %195 = vmatprep.mubr.bf16.mxu0 0
    %196 = vmatmul.mubr.bf16.gmra.mrb[0].mxu0 %v161
    %v197 = vpop.f32.mrb[0].mxu0
    %v198 = vadd.f32 %v143, %v197
    %v199 = vpop.f32.mrb[0].mxu0
    %v200 = vpop.f32.mrb[0].mxu0
    %v201 = vpop.f32.mrb[0].mxu0
    %202 = vdwg.mxu0
    %v203 = vld [vmem:[%s4] sm:$0x1]
    %v205 = vlaneseq
    %v206 = vshrl.u32 %v205, 7
    %v207 = vsub.s32 0, %v206
    %v208 = vrot.slane %v203, %v207
    %v210 = vadd.f32 %v198, %v208
    %v211 = vxor.u32 %v210, 2147483648
    %v212 = vmul.f32 %v211, 1.442695
    %v213 = vpow.pop %v212
    %v214 = vadd.f32 %v213, 1.0
    %v215 = vrcp.pop %v214
    %v216 = vmul.f32 1.0, %v215
    %v217 = vmul.f32 %v210, %v216
    %v218 = vld [vmem:[%s5] sm:$0x1]
    %v220 = vlaneseq
    %v221 = vshrl.u32 %v220, 7
    %v222 = vsub.s32 0, %v221
    %v223 = vrot.slane %v218, %v222
    %v225 = vmul.f32 %v217, %v223
    %v226 = vsel %vm104, %v225, 0.0
    %227 = vadd.xlane.f32.xlu0 %v226
    %v228 = vpop.xlane.xlu0 %227
    %v229 = vld [vmem:[#allocation2] sm:$0x1]
    %v231 = vlaneseq
    %v232 = vshrl.u32 %v231, 7
    %v233 = vsub.s32 0, %v232
    %v234 = vrot.slane %v229, %v233
    %v236 = vadd.f32 %v228, %v234
    %v237 = vxor.u32 %v236, 2147483648
    %v238 = vmul.f32 %v237, 1.442695
    %v239 = vpow.pop %v238
    %v240 = vadd.f32 %v239, 1.0
    %v241 = vrcp.pop %v240
    %v242 = vmul.f32 1.0, %v241
    %vm243 = vcmask 7168
    %244 = vst.msk [vmem:[%s7] sm:$0xff] %vm243, %v242
    // Predicated region
    $region46: #{tpu_custom_call.1} parent=1 // pred_check
      _
    $region47: #{tpu_custom_call.1} parent=1 // pred_check_branch
      %246 = sbr.rel (0) target = $region49
    $region48: #{tpu_custom_call.1} parent=1 // pred_region
      _
    $region49: #{tpu_custom_call.1} parent=1 // pred_fallthru
      _
    // Predicated region
    $region50: #{tpu_custom_call.1} parent=1 // pred_check
      _
    $region51: #{tpu_custom_call.1} parent=1 // pred_check_branch
      %248 = sbr.rel (0) target = $region53
    $region52: #{tpu_custom_call.1} parent=1 // pred_region
      _
    $region53: #{tpu_custom_call.1} parent=1 // pred_fallthru
      _
    %249 = vsyncpa [#allocation4], 1
    %250 = vsyncpa [#allocation6], 1
    %251 = vsyncpa [#allocation9], 1

</llo_original>
